<compile_context>
chip_gen: v7x
topology: tpu7x:2x2x1
jax: 0.10.0
libtpu: 0.0.40
codegen_flags: <defaults>
</compile_context>

<pallas_src>
import functools

import jax
import jax.numpy as jnp
from jax.experimental import pallas as pl
from jax.experimental.pallas import tpu as pltpu


# ---------------------------------------------------------------------------
# Kernels
# ---------------------------------------------------------------------------

def _channel_add_from_context(ctx, w1, b1, g, beta, w2, b2, eps):
    """ctx: [C, 1] gated context -> channel_add term [C, 1] (all f32)."""
    t = jnp.dot(w1, ctx, preferred_element_type=jnp.float32) + b1          # [P, 1]
    mu = jnp.mean(t, axis=0, keepdims=True)
    var = jnp.mean((t - mu) * (t - mu), axis=0, keepdims=True)             # biased var (torch LN)
    t = (t - mu) * jax.lax.rsqrt(var + eps)
    t = jnp.maximum(t * g + beta, 0.0)                                     # LN affine + ReLU
    return jnp.dot(w2, t, preferred_element_type=jnp.float32) + b2         # [C, 1]


def _context_block_fused_kernel(x_ref, wmask_ref, bmask_ref, gate_ref,
                                w1_ref, b1_ref, g_ref, beta_ref,
                                w2_ref, b2_ref, out_ref, *, eps):
    # x stays in its native dtype (bf16 or f32): no [C,HW] f32 copy is made.
    x = x_ref[0]                                                           # [C, HW]

    # conv_mask 1x1 (C -> 1) on the MXU: [1, C] @ [C, HW] -> [1, HW].
    # The tiny weight is downcast to x's dtype so bf16 inputs run natively.
    logits = (jnp.dot(wmask_ref[...].astype(x.dtype), x,
                      preferred_element_type=jnp.float32)
              + bmask_ref[...])                                            # [1, HW] f32

    # Softmax over spatial positions (torch softmax(dim=2) over H*W).
    m = jnp.max(logits, axis=-1, keepdims=True)                            # [1, 1]
    p = jnp.exp(logits - m)                                                # [1, HW]
    denom = jnp.sum(p, axis=-1, keepdims=True)                             # [1, 1]

    # Attention pooling on the MXU: ctx[c] = sum_hw x[c,hw] * p[hw]  -> [C, 1].
    ctx = jax.lax.dot_general(x, p.astype(x.dtype), (((1,), (1,)), ((), ())),
                              preferred_element_type=jnp.float32)
    # Exact divide (single scalar per batch -> approx reciprocal saves nothing).
    # PAAS gate: gate = sigmoid(weighted_matrix) / scale precomputed outside.
    ctx = ctx / denom * gate_ref[...]                                      # [C, 1]

    add = _channel_add_from_context(ctx, w1_ref[...], b1_ref[...], g_ref[...],
                                    beta_ref[...], w2_ref[...], b2_ref[...], eps)

    # out = x + channel_add_term, broadcast over HW (lanes); lazy upcast only here.
    out_ref[0] = (x.astype(jnp.float32) + add).astype(out_ref.dtype)


def _context_reduce_kernel(x_ref, wmask_ref, bmask_ref, gate_ref,
                           w1_ref, b1_ref, g_ref, beta_ref,
                           w2_ref, b2_ref, add_ref,
                           m_sc, l_sc, ctx_sc, *, eps, hw_total, hw_tile, masked):
    """Tiled pass 1: online softmax over HW tiles -> channel_add column [C, 1]."""
    t_idx = pl.program_id(1)

    @pl.when(t_idx == 0)
    def _():
        m_sc[...] = jnp.full_like(m_sc, -jnp.inf)
        l_sc[...] = jnp.zeros_like(l_sc)
        ctx_sc[...] = jnp.zeros_like(ctx_sc)

    x = x_ref[0]                                                           # [C, T] native dtype
    logits = (jnp.dot(wmask_ref[...].astype(x.dtype), x,
                      preferred_element_type=jnp.float32)
              + bmask_ref[...])                                            # [1, T]
    if masked:
        # HW was zero-padded in the wrapper: exclude padded columns from softmax.
        pos = t_idx * hw_tile + jax.lax.broadcasted_iota(jnp.int32, logits.shape, 1)
        logits = jnp.where(pos < hw_total, logits, -jnp.inf)

    m_new = jnp.maximum(m_sc[...], jnp.max(logits, axis=-1, keepdims=True))
    alpha = jnp.exp(m_sc[...] - m_new)                                     # rescale old stats
    p = jnp.exp(logits - m_new)                                            # [1, T]
    l_sc[...] = alpha * l_sc[...] + jnp.sum(p, axis=-1, keepdims=True)
    ctx_sc[...] = alpha * ctx_sc[...] + jax.lax.dot_general(
        x, p.astype(x.dtype), (((1,), (1,)), ((), ())),
        preferred_element_type=jnp.float32)
    m_sc[...] = m_new

    @pl.when(t_idx == pl.num_programs(1) - 1)
    def _():
        ctx = ctx_sc[...] / l_sc[...] * gate_ref[...]                      # exact divide
        add = _channel_add_from_context(ctx, w1_ref[...], b1_ref[...], g_ref[...],
                                        beta_ref[...], w2_ref[...], b2_ref[...], eps)
        add_ref[0] = add.astype(add_ref.dtype)


def _broadcast_add_kernel(x_ref, add_ref, out_ref):
    """Tiled pass 2: out = x + add (add broadcast over the HW lanes)."""
    out_ref[0] = (x_ref[0].astype(jnp.float32) + add_ref[0]).astype(out_ref.dtype)


# ---------------------------------------------------------------------------
# Wrapper helpers
# ---------------------------------------------------------------------------

def _round_up(x, m):
    return ((x + m - 1) // m) * m


def _tpu_vmem_capacity_bytes():
    """Per-core VMEM capacity; conservative 64 MiB (v7x) if the query fails."""
    try:
        cap = int(pltpu.get_tpu_info().vmem_capacity_bytes)
        if cap > 0:
            return cap
    except Exception:
        pass
    return 64 << 20


def _param_vmem_bytes(p):
    """(8,128)-padded VMEM footprint of one (2-D) parameter buffer."""
    r, c = p.shape[-2], p.shape[-1]
    return _round_up(r, 8) * _round_up(c, 128) * jnp.dtype(p.dtype).itemsize


def _param_spec(shape, grid_rank):
    nd = len(shape)
    if grid_rank == 1:
        return pl.BlockSpec(shape, lambda b: (0,) * nd)
    return pl.BlockSpec(shape, lambda b, t: (0,) * nd)


def _largest_tile(hw_pad, bytes_fn, budget):
    """Largest multiple-of-128 divisor of hw_pad whose per-step bytes fit the budget."""
    best = None
    t = 128
    while t <= hw_pad:
        if hw_pad % t == 0 and bytes_fn(t) <= budget:
            best = t
        t += 128
    return best


# ---------------------------------------------------------------------------
# Wrapper
# ---------------------------------------------------------------------------

def context_block_paas(x_nchw, params, *, scale, hw_tile=None,
                       vmem_budget_bytes=None, donate_x=False):
    """x_nchw: [B, C, H, W] (PyTorch NCHW). Returns [B, C, H, W].

    donate_x: only set True when x is actually donated at the jit boundary;
    otherwise the forced aliasing makes XLA insert a hidden full copy of x.
    """
    B, C, H, W = x_nchw.shape
    HW = H * W
    dtype = x_nchw.dtype
    itemsize = jnp.dtype(dtype).itemsize
    eps = 1e-5

    # Generation-aware VMEM budgeting: never request more than physical VMEM.
    cap = _tpu_vmem_capacity_bytes()
    vmem_ceiling = cap - (8 << 20)                              # hard cap for vmem_limit_bytes
    if vmem_budget_bytes is None:
        # ~112 MiB on v5e/v6e (128 MiB VMEM), ~56 MiB on v7x (64 MiB VMEM).
        vmem_budget_bytes = cap - max(cap // 8, 8 << 20)
    budget = max(min(vmem_budget_bytes, vmem_ceiling), 16 << 20)

    # Free reshape -- no transposes; HW stays contiguous in the lane dimension.
    x_flat = x_nchw.reshape(B, C, HW)

    # PAAS gate is parameter-only: fold sigmoid + /scale outside the kernel.
    gate = jax.nn.sigmoid(params["wm"]) / jnp.asarray(scale, params["wm"].dtype)  # [C, 1]

    param_args = (params["wmask"], params["bmask"], gate,
                  params["w1"], params["b1"], params["ln_g"], params["ln_b"],
                  params["w2"], params["b2"])

    # --- VMEM accounting: x blocks, resident (double-buffered) params, f32 temps.
    C_pad = _round_up(C, 8)
    hw_lane = _round_up(HW, 128)
    param_bytes = 2 * sum(_param_vmem_bytes(p) for p in param_args)   # default 2-deep buffers
    x_blk_fused = C_pad * hw_lane * itemsize
    # In-kernel f32 body temporaries: the lazily-upcast x+add result (only when
    # x is sub-32-bit) plus the [1,HW] logits / p rows.
    fused_f32_temps = (C_pad * hw_lane * 4 if itemsize < 4 else 0) + 4 * hw_lane * 4
    slop = 2 << 20
    fused_db_bytes = 4 * x_blk_fused + param_bytes + fused_f32_temps + slop  # x in+out, 2-deep
    fused_sb_bytes = 2 * x_blk_fused + param_bytes + fused_f32_temps + slop  # x in+out, 1-deep

    aliases = {0: 0} if donate_x else {}

    # ---- Fused single-pass path (x read once, written once) ----------------
    if hw_tile is None and min(fused_db_bytes, fused_sb_bytes) <= budget:
        single_buffer = fused_db_bytes > budget
        step_bytes = fused_sb_bytes if single_buffer else fused_db_bytes
        vmem_limit = int(max(min(step_bytes + (4 << 20), vmem_ceiling), 32 << 20))

        if single_buffer:
            # v7x-sized blocks: single-buffer x in/out instead of falling back to
            # the 1.5x-HBM-traffic tiled path (small latency bubble, big traffic win).
            x_in_spec = pl.BlockSpec((1, C, HW), lambda b: (b, 0, 0),
                                     pipeline_mode=pl.Buffered(1))
            x_out_spec = pl.BlockSpec((1, C, HW), lambda b: (b, 0, 0),
                                      pipeline_mode=pl.Buffered(1))
        else:
            x_in_spec = pl.BlockSpec((1, C, HW), lambda b: (b, 0, 0))
            x_out_spec = pl.BlockSpec((1, C, HW), lambda b: (b, 0, 0))

        out_flat = pl.pallas_call(
            functools.partial(_context_block_fused_kernel, eps=eps),
            out_shape=jax.ShapeDtypeStruct((B, C, HW), dtype),
            grid=(B,),
            in_specs=[x_in_spec] + [_param_spec(p.shape, 1) for p in param_args],
            out_specs=x_out_spec,
            input_output_aliases=aliases,
            compiler_params=pltpu.CompilerParams(
                dimension_semantics=("parallel",),
                vmem_limit_bytes=vmem_limit),
        )(x_flat, *param_args)
        return out_flat.reshape(B, C, H, W)

    # ---- Tiled fallback (bounded VMEM; very large HW*C) ---------------------
    if hw_tile is not None:
        if hw_tile % 128 != 0:
            raise ValueError("hw_tile must be a multiple of 128")
        hw_pad = _round_up(HW, hw_tile)
        t1 = t2 = hw_tile                       # explicit override: use for both passes
    else:
        hw_pad = _round_up(HW, 128)
        t1 = t2 = None

    def pass1_bytes(t):                         # x input only is double-buffered
        return (2 * C_pad * t * itemsize
                + param_bytes
                + 2 * C_pad * 128 * 4           # add-col output
                + 3 * C_pad * 128 * 4           # m / l / ctx scratch (padded)
                + 6 * t * 4                     # logits / p / mask rows
                + slop)

    def pass2_bytes(t):                         # x input + output double-buffered
        return (4 * C_pad * t * itemsize
                + 2 * C_pad * 128 * 4           # add-col input
                + (C_pad * t * 4 if itemsize < 4 else 0)
                + slop)

    if t2 is None:
        t2 = _largest_tile(hw_pad, pass2_bytes, budget)
        if t2 is None:
            raise ValueError("even a 128-lane HW tile does not fit the VMEM budget")
        # Pass 1 only double-buffers the input, so it can afford a larger tile
        # (fewer grid steps / online-softmax rescales, better DMA efficiency).
        t1 = _largest_tile(hw_pad, pass1_bytes, budget) or t2

    needs_pad = hw_pad != HW
    if needs_pad:
        # One extra copy of x; only hit on the fallback path with non-128-multiple HW.
        x_t = jnp.pad(x_flat, ((0, 0), (0, 0), (0, hw_pad - HW)))
    else:
        x_t = x_flat
    n1 = hw_pad // t1
    n2 = hw_pad // t2

    # Pass 1: online-softmax reduction over HW tiles -> per-batch add column.
    vmem_limit1 = int(max(min(pass1_bytes(t1) + (4 << 20), vmem_ceiling), 32 << 20))
    add_col = pl.pallas_call(
        functools.partial(_context_reduce_kernel, eps=eps,
                          hw_total=HW, hw_tile=t1, masked=needs_pad),
        out_shape=jax.ShapeDtypeStruct((B, C, 1), jnp.float32),
        grid=(B, n1),
        in_specs=[pl.BlockSpec((1, C, t1), lambda b, t: (b, 0, t))]
                 + [_param_spec(p.shape, 2) for p in param_args],
        out_specs=pl.BlockSpec((1, C, 1), lambda b, t: (b, 0, 0)),
        scratch_shapes=[pltpu.VMEM((1, 1), jnp.float32),   # running max
                        pltpu.VMEM((1, 1), jnp.float32),   # running denom
                        pltpu.VMEM((C, 1), jnp.float32)],  # running context
        compiler_params=pltpu.CompilerParams(
            dimension_semantics=("parallel", "arbitrary"),
            vmem_limit_bytes=vmem_limit1),
    )(x_t, *param_args)

    # Pass 2: lane-dense broadcast add, both grid axes parallel (megacore).
    vmem_limit2 = int(max(min(pass2_bytes(t2) + (4 << 20), vmem_ceiling), 32 << 20))
    out_flat = pl.pallas_call(
        _broadcast_add_kernel,
        out_shape=jax.ShapeDtypeStruct((B, C, hw_pad), dtype),
        grid=(B, n2),
        in_specs=[pl.BlockSpec((1, C, t2), lambda b, t: (b, 0, t)),
                  pl.BlockSpec((1, C, 1), lambda b, t: (b, 0, 0))],
        out_specs=pl.BlockSpec((1, C, t2), lambda b, t: (b, 0, t)),
        input_output_aliases=(aliases if not needs_pad else {}),
        compiler_params=pltpu.CompilerParams(
            dimension_semantics=("parallel", "parallel"),
            vmem_limit_bytes=vmem_limit2),
    )(x_t, add_col)

    if needs_pad:
        out_flat = out_flat[:, :, :HW]
    return out_flat.reshape(B, C, H, W)


# ---------------------------------------------------------------------------
# Pure-JAX reference & synthetic params
# ---------------------------------------------------------------------------

def context_block_ref(x, params, *, scale):
    """Pure-JAX reference mirroring the PyTorch forward (PAAS branch)."""
    B, C, H, W = x.shape
    x_flat = x.reshape(B, C, H * W)
    logits = jnp.einsum("bcs,c->bs", x_flat, params["wmask"][0]) + params["bmask"][0, 0]
    attn = jax.nn.softmax(logits, axis=-1)                        # [B, HW]
    context = jnp.einsum("bcs,bs->bc", x_flat, attn)              # [B, C]
    context = (context / scale) * jax.nn.sigmoid(params["wm"][:, 0])
    t = context @ params["w1"].T + params["b1"][:, 0]             # [B, P]
    mu = jnp.mean(t, axis=-1, keepdims=True)
    var = jnp.mean((t - mu) ** 2, axis=-1, keepdims=True)
    t = (t - mu) / jnp.sqrt(var + 1e-5)
    t = t * params["ln_g"][:, 0] + params["ln_b"][:, 0]
    t = jnp.maximum(t, 0.0)
    add = t @ params["w2"].T + params["b2"][:, 0]                 # [B, C]
    return x + add[:, :, None, None]


def init_params(key, inplanes, ratio):
    """Deterministic synthetic init matching the module's parameter shapes."""
    C = inplanes
    P = int(inplanes * ratio)
    ks = jax.random.split(key, 7)
    return {
        # nn.Conv2d(C, 1, 1): weight [1, C, 1, 1] -> [1, C]; bias [1] -> [1, 1]
        "wmask": 0.1 * jax.random.normal(ks[0], (1, C), jnp.float32),
        "bmask": 0.1 * jax.random.normal(ks[1], (1, 1), jnp.float32),
        # weighted_matrix [C, 1] ~ N(0, 0.01) (native PyTorch shape)
        "wm": 0.01 * jax.random.normal(ks[2], (C, 1), jnp.float32),
        # nn.Conv2d(C, P, 1): weight [P, C, 1, 1] -> [P, C]; bias [P] -> [P, 1]
        "w1": 0.1 * jax.random.normal(ks[3], (P, C), jnp.float32),
        "b1": 0.1 * jax.random.normal(ks[4], (P, 1), jnp.float32),
        # nn.LayerNorm([P, 1, 1]) default affine init -> [P, 1]
        "ln_g": jnp.ones((P, 1), jnp.float32),
        "ln_b": jnp.zeros((P, 1), jnp.float32),
        # nn.Conv2d(P, C, 1): weight [C, P, 1, 1] -> [C, P]; bias [C] -> [C, 1]
        "w2": 0.1 * jax.random.normal(ks[5], (C, P), jnp.float32),
        "b2": 0.1 * jax.random.normal(ks[6], (C, 1), jnp.float32),
    }


if __name__ == "__main__":
    # Small shapes consistent with the module: inplanes=16, ratio=0.25 -> planes=4.
    B, C = 2, 16
    ratio, scale = 0.25, 8.0

    key = jax.random.PRNGKey(0)
    k_x, k_x2, k_p = jax.random.split(key, 3)
    params = init_params(k_p, C, ratio)

    # Case A: 16x16 feature map -> fused single-pass path and forced tiled path.
    x = jax.random.normal(k_x, (B, C, 16, 16), dtype=jnp.float32)
    ref = context_block_ref(x, params, scale=scale)
    out_fused = jax.block_until_ready(context_block_paas(x, params, scale=scale))
    out_tiled = jax.block_until_ready(
        context_block_paas(x, params, scale=scale, hw_tile=128))

    # Case B: 14x14 feature map (HW=196, no 128-multiple divisor) -> padded +
    # masked tiled fallback exercising the online-softmax tail handling.
    x2 = jax.random.normal(k_x2, (B, C, 14, 14), dtype=jnp.float32)
    ref2 = context_block_ref(x2, params, scale=scale)
    out_pad = jax.block_until_ready(
        context_block_paas(x2, params, scale=scale, hw_tile=128))

    checks = (("fused", out_fused, ref),
              ("tiled", out_tiled, ref),
              ("tiled_padded", out_pad, ref2))
    for name, out, r in checks:
        assert out.shape == r.shape
        err = float(jnp.max(jnp.abs(out - r)))
        # Exact softmax divide now; tolerance leaves margin for MXU f32 rounding.
        assert err < 1e-3, f"{name}: max abs err = {err}"

    print("KERNEL_OK")
</pallas_src>

<mosaic_0001>
module attributes {stable_mosaic.version = 11 : i64} {
  func.func @_context_block_fused_kernel(%arg0: i32, %arg1: memref<1x16x256xf32, #tpu.memory_space<vmem>>, %arg2: memref<1x16xf32, #tpu.memory_space<vmem>>, %arg3: memref<1x1xf32, #tpu.memory_space<vmem>>, %arg4: memref<16x1xf32, #tpu.memory_space<vmem>>, %arg5: memref<4x16xf32, #tpu.memory_space<vmem>>, %arg6: memref<4x1xf32, #tpu.memory_space<vmem>>, %arg7: memref<4x1xf32, #tpu.memory_space<vmem>>, %arg8: memref<4x1xf32, #tpu.memory_space<vmem>>, %arg9: memref<16x4xf32, #tpu.memory_space<vmem>>, %arg10: memref<16x1xf32, #tpu.memory_space<vmem>>, %arg11: memref<1x16x256xf32, #tpu.memory_space<vmem>>) attributes {dimension_semantics = [#tpu.dimension_semantics<parallel>], iteration_bounds = array<i64: 2>, scalar_prefetch = 0 : i64, scratch_operands = 0 : i64, tpu.core_type = #tpu.core_type<tc>, window_params = [{transform_indices = @transform_0, window_bounds = array<i64: 1, 16, 256>}, {pipeline_mode = #tpu.pipeline_mode<synchronous>, transform_indices = @transform_1, window_bounds = array<i64: 1, 16>}, {pipeline_mode = #tpu.pipeline_mode<synchronous>, transform_indices = @transform_2, window_bounds = array<i64: 1, 1>}, {pipeline_mode = #tpu.pipeline_mode<synchronous>, transform_indices = @transform_3, window_bounds = array<i64: 16, 1>}, {pipeline_mode = #tpu.pipeline_mode<synchronous>, transform_indices = @transform_4, window_bounds = array<i64: 4, 16>}, {pipeline_mode = #tpu.pipeline_mode<synchronous>, transform_indices = @transform_5, window_bounds = array<i64: 4, 1>}, {pipeline_mode = #tpu.pipeline_mode<synchronous>, transform_indices = @transform_6, window_bounds = array<i64: 4, 1>}, {pipeline_mode = #tpu.pipeline_mode<synchronous>, transform_indices = @transform_7, window_bounds = array<i64: 4, 1>}, {pipeline_mode = #tpu.pipeline_mode<synchronous>, transform_indices = @transform_8, window_bounds = array<i64: 16, 4>}, {pipeline_mode = #tpu.pipeline_mode<synchronous>, transform_indices = @transform_9, window_bounds = array<i64: 16, 1>}, {transform_indices = @transform_10, window_bounds = array<i64: 1, 16, 256>}]} {
    %c0 = arith.constant 0 : index
    %c0_0 = arith.constant 0 : index
    %c0_1 = arith.constant 0 : index
    %0 = vector.load %arg1[%c0, %c0_0, %c0_1] : memref<1x16x256xf32, #tpu.memory_space<vmem>>, vector<1x16x256xf32>
    %1 = vector.shape_cast %0 : vector<1x16x256xf32> to vector<16x256xf32>
    %c0_2 = arith.constant 0 : index
    %c0_3 = arith.constant 0 : index
    %2 = vector.load %arg2[%c0_2, %c0_3] : memref<1x16xf32, #tpu.memory_space<vmem>>, vector<1x16xf32>
    %cst = arith.constant dense<0.000000e+00> : vector<1x256xf32>
    %3 = tpu.matmul %2, %1, %cst {dimension_numbers = #tpu.dot_dimension_numbers<[1], [0], [0], [1], [0, 0, 1, 1], [], []>} : vector<1x16xf32>, vector<16x256xf32>, vector<1x256xf32> -> vector<1x256xf32>
    %c0_4 = arith.constant 0 : index
    %c0_5 = arith.constant 0 : index
    %4 = vector.load %arg3[%c0_4, %c0_5] : memref<1x1xf32, #tpu.memory_space<vmem>>, vector<1x1xf32>
    %5 = vector.broadcast %4 : vector<1x1xf32> to vector<1x256xf32>
    %6 = arith.addf %3, %5 : vector<1x256xf32>
    %cst_6 = arith.constant dense<0xFF800000> : vector<1xf32>
    %7 = vector.multi_reduction <maximumf>, %6, %cst_6 [1] : vector<1x256xf32> to vector<1xf32>
    %8 = vector.shape_cast %7 : vector<1xf32> to vector<1x1xf32>
    %9 = vector.broadcast %8 : vector<1x1xf32> to vector<1x256xf32>
    %10 = arith.subf %6, %9 : vector<1x256xf32>
    %11 = math.exp %10 : vector<1x256xf32>
    %cst_7 = arith.constant dense<0.000000e+00> : vector<1xf32>
    %12 = vector.multi_reduction <add>, %11, %cst_7 [1] : vector<1x256xf32> to vector<1xf32>
    %13 = vector.shape_cast %12 : vector<1xf32> to vector<1x1xf32>
    %cst_8 = arith.constant dense<0.000000e+00> : vector<16x1xf32>
    %14 = tpu.matmul %1, %11, %cst_8 {dimension_numbers = #tpu.dot_dimension_numbers<[1], [1], [0], [0], [0, 0, 1, 0], [], []>} : vector<16x256xf32>, vector<1x256xf32>, vector<16x1xf32> -> vector<16x1xf32>
    %15 = vector.broadcast %13 : vector<1x1xf32> to vector<16x1xf32>
    %16 = arith.divf %14, %15 : vector<16x1xf32>
    %c0_9 = arith.constant 0 : index
    %c0_10 = arith.constant 0 : index
    %17 = vector.load %arg4[%c0_9, %c0_10] : memref<16x1xf32, #tpu.memory_space<vmem>>, vector<16x1xf32>
    %18 = arith.mulf %16, %17 : vector<16x1xf32>
    %c0_11 = arith.constant 0 : index
    %c0_12 = arith.constant 0 : index
    %19 = vector.load %arg5[%c0_11, %c0_12] : memref<4x16xf32, #tpu.memory_space<vmem>>, vector<4x16xf32>
    %c0_13 = arith.constant 0 : index
    %c0_14 = arith.constant 0 : index
    %20 = vector.load %arg6[%c0_13, %c0_14] : memref<4x1xf32, #tpu.memory_space<vmem>>, vector<4x1xf32>
    %c0_15 = arith.constant 0 : index
    %c0_16 = arith.constant 0 : index
    %21 = vector.load %arg7[%c0_15, %c0_16] : memref<4x1xf32, #tpu.memory_space<vmem>>, vector<4x1xf32>
    %c0_17 = arith.constant 0 : index
    %c0_18 = arith.constant 0 : index
    %22 = vector.load %arg8[%c0_17, %c0_18] : memref<4x1xf32, #tpu.memory_space<vmem>>, vector<4x1xf32>
    %c0_19 = arith.constant 0 : index
    %c0_20 = arith.constant 0 : index
    %23 = vector.load %arg9[%c0_19, %c0_20] : memref<16x4xf32, #tpu.memory_space<vmem>>, vector<16x4xf32>
    %c0_21 = arith.constant 0 : index
    %c0_22 = arith.constant 0 : index
    %24 = vector.load %arg10[%c0_21, %c0_22] : memref<16x1xf32, #tpu.memory_space<vmem>>, vector<16x1xf32>
    %cst_23 = arith.constant dense<0.000000e+00> : vector<4x1xf32>
    %25 = tpu.matmul %19, %18, %cst_23 {dimension_numbers = #tpu.dot_dimension_numbers<[1], [0], [0], [1], [0, 0, 1, 1], [], []>} : vector<4x16xf32>, vector<16x1xf32>, vector<4x1xf32> -> vector<4x1xf32>
    %26 = arith.addf %25, %20 : vector<4x1xf32>
    %cst_24 = arith.constant dense<0.000000e+00> : vector<1xf32>
    %27 = vector.multi_reduction <add>, %26, %cst_24 [0] : vector<4x1xf32> to vector<1xf32>
    %28 = vector.shape_cast %27 : vector<1xf32> to vector<1x1xf32>
    %cst_25 = arith.constant 4.000000e+00 : f32
    %29 = vector.broadcast %cst_25 : f32 to vector<1x1xf32>
    %30 = arith.divf %28, %29 : vector<1x1xf32>
    %31 = vector.broadcast %30 : vector<1x1xf32> to vector<4x1xf32>
    %32 = arith.subf %26, %31 : vector<4x1xf32>
    %33 = vector.broadcast %30 : vector<1x1xf32> to vector<4x1xf32>
    %34 = arith.subf %26, %33 : vector<4x1xf32>
    %35 = arith.mulf %32, %34 : vector<4x1xf32>
    %cst_26 = arith.constant dense<0.000000e+00> : vector<1xf32>
    %36 = vector.multi_reduction <add>, %35, %cst_26 [0] : vector<4x1xf32> to vector<1xf32>
    %37 = vector.shape_cast %36 : vector<1xf32> to vector<1x1xf32>
    %cst_27 = arith.constant 4.000000e+00 : f32
    %38 = vector.broadcast %cst_27 : f32 to vector<1x1xf32>
    %39 = arith.divf %37, %38 : vector<1x1xf32>
    %40 = vector.broadcast %30 : vector<1x1xf32> to vector<4x1xf32>
    %41 = arith.subf %26, %40 : vector<4x1xf32>
    %cst_28 = arith.constant 9.99999974E-6 : f32
    %42 = vector.broadcast %cst_28 : f32 to vector<1x1xf32>
    %43 = arith.addf %39, %42 : vector<1x1xf32>
    %44 = math.rsqrt %43 : vector<1x1xf32>
    %45 = vector.broadcast %44 : vector<1x1xf32> to vector<4x1xf32>
    %46 = arith.mulf %41, %45 : vector<4x1xf32>
    %47 = arith.mulf %46, %21 : vector<4x1xf32>
    %48 = arith.addf %47, %22 : vector<4x1xf32>
    %cst_29 = arith.constant 0.000000e+00 : f32
    %49 = vector.broadcast %cst_29 : f32 to vector<4x1xf32>
    %50 = arith.maximumf %48, %49 : vector<4x1xf32>
    %cst_30 = arith.constant dense<0.000000e+00> : vector<16x1xf32>
    %51 = tpu.matmul %23, %50, %cst_30 {dimension_numbers = #tpu.dot_dimension_numbers<[1], [0], [0], [1], [0, 0, 1, 1], [], []>} : vector<16x4xf32>, vector<4x1xf32>, vector<16x1xf32> -> vector<16x1xf32>
    %52 = arith.addf %51, %24 : vector<16x1xf32>
    %53 = vector.broadcast %52 : vector<16x1xf32> to vector<16x256xf32>
    %54 = arith.addf %1, %53 : vector<16x256xf32>
    %c0_31 = arith.constant 0 : index
    %c0_32 = arith.constant 0 : index
    %c0_33 = arith.constant 0 : index
    %55 = vector.load %arg11[%c0_31, %c0_32, %c0_33] : memref<1x16x256xf32, #tpu.memory_space<vmem>>, vector<1x16x256xf32>
    %56 = vector.shape_cast %55 : vector<1x16x256xf32> to vector<16x256xf32>
    %57 = vector.shape_cast %54 : vector<16x256xf32> to vector<1x16x256xf32>
    tpu.vector_store %arg11[%c0_31, %c0_32, %c0_33], %57 {strides = array<i32>} : memref<1x16x256xf32, #tpu.memory_space<vmem>>, vector<1x16x256xf32>,
    return
  }
  func.func @transform_0(%arg0: i32) -> (i32, i32, i32) {
    %c0_i32 = arith.constant 0 : i32
    %c0_i32_0 = arith.constant 0 : i32
    %c0_i32_1 = arith.constant 0 : i32
    return %arg0, %c0_i32, %c0_i32_0 : i32, i32, i32
  }
  func.func @transform_1(%arg0: i32) -> (i32, i32) {
    %c0_i32 = arith.constant 0 : i32
    %c0_i32_0 = arith.constant 0 : i32
    %c0_i32_1 = arith.constant 0 : i32
    return %c0_i32, %c0_i32_0 : i32, i32
  }
  func.func @transform_2(%arg0: i32) -> (i32, i32) {
    %c0_i32 = arith.constant 0 : i32
    %c0_i32_0 = arith.constant 0 : i32
    %c0_i32_1 = arith.constant 0 : i32
    return %c0_i32, %c0_i32_0 : i32, i32
  }
  func.func @transform_3(%arg0: i32) -> (i32, i32) {
    %c0_i32 = arith.constant 0 : i32
    %c0_i32_0 = arith.constant 0 : i32
    %c0_i32_1 = arith.constant 0 : i32
    return %c0_i32, %c0_i32_0 : i32, i32
  }
  func.func @transform_4(%arg0: i32) -> (i32, i32) {
    %c0_i32 = arith.constant 0 : i32
    %c0_i32_0 = arith.constant 0 : i32
    %c0_i32_1 = arith.constant 0 : i32
    return %c0_i32, %c0_i32_0 : i32, i32
  }
  func.func @transform_5(%arg0: i32) -> (i32, i32) {
    %c0_i32 = arith.constant 0 : i32
    %c0_i32_0 = arith.constant 0 : i32
    %c0_i32_1 = arith.constant 0 : i32
    return %c0_i32, %c0_i32_0 : i32, i32
  }
  func.func @transform_6(%arg0: i32) -> (i32, i32) {
    %c0_i32 = arith.constant 0 : i32
    %c0_i32_0 = arith.constant 0 : i32
    %c0_i32_1 = arith.constant 0 : i32
    return %c0_i32, %c0_i32_0 : i32, i32
  }
  func.func @transform_7(%arg0: i32) -> (i32, i32) {
    %c0_i32 = arith.constant 0 : i32
    %c0_i32_0 = arith.constant 0 : i32
    %c0_i32_1 = arith.constant 0 : i32
    return %c0_i32, %c0_i32_0 : i32, i32
  }
  func.func @transform_8(%arg0: i32) -> (i32, i32) {
    %c0_i32 = arith.constant 0 : i32
    %c0_i32_0 = arith.constant 0 : i32
    %c0_i32_1 = arith.constant 0 : i32
    return %c0_i32, %c0_i32_0 : i32, i32
  }
  func.func @transform_9(%arg0: i32) -> (i32, i32) {
    %c0_i32 = arith.constant 0 : i32
    %c0_i32_0 = arith.constant 0 : i32
    %c0_i32_1 = arith.constant 0 : i32
    return %c0_i32, %c0_i32_0 : i32, i32
  }
  func.func @transform_10(%arg0: i32) -> (i32, i32, i32) {
    %c0_i32 = arith.constant 0 : i32
    %c0_i32_0 = arith.constant 0 : i32
    %c0_i32_1 = arith.constant 0 : i32
    return %arg0, %c0_i32, %c0_i32_0 : i32, i32, i32
  }
}

</mosaic_0001>

<llo_original>
// kernel: tpu_custom_call.1
$region0: #{tpu_custom_call.1}
  #allocation0 [shape = 'u32[]', space=smem, size = 0x4, offset = 0x4, fixed_abs, tag = 'smem constant byte address 0x4 - core index']
  #allocation1 [shape = 'u32[144,128]{1,0:T(1,128)}', space=vmem, size = 0x12000, scoped, tag = 'internal scratch']
  #allocation2 [shape = 'f32[1,1]{1,0:T(1,128)S(1)}', space=vmem, size = 0x200, scoped, tag = 'scoped memory for tpu_custom_call.1']
  %s0 = inlined_call_operand.vmem [shape: f32[2,16,256], index: 0, kind: input, shape index: {}]
  %s1 = inlined_call_operand.vmem [shape: f32[1,16], index: 1, kind: input, shape index: {}]
  %s2 = inlined_call_operand.<no memory space> [shape: f32[1,1], index: 2, kind: input, shape index: {}]
  %s3 = inlined_call_operand.vmem [shape: f32[16,1], index: 3, kind: input, shape index: {}]
  %s4 = inlined_call_operand.vmem [shape: f32[4,16], index: 4, kind: input, shape index: {}]
  %s5 = inlined_call_operand.vmem [shape: f32[4,1], index: 5, kind: input, shape index: {}]
  %s6 = inlined_call_operand.vmem [shape: f32[4,1], index: 6, kind: input, shape index: {}]
  %s7 = inlined_call_operand.vmem [shape: f32[4,1], index: 7, kind: input, shape index: {}]
  %s8 = inlined_call_operand.vmem [shape: f32[16,4], index: 8, kind: input, shape index: {}]
  %s9 = inlined_call_operand.vmem [shape: f32[16,1], index: 9, kind: input, shape index: {}]
  %s10 = inlined_call_operand.hbm [shape: f32[2,16,256], index: 10, kind: output, shape index: {}]
  %s11 = sld [smem:[#allocation0]]
  $region73: #{tpu_custom_call.1} parent=0
    _
  %s13 = ssub.s32 1, %s11
  %s14 = scalar_select 0, %s13, %s11
  %v15 = vstv %s2
  %16 = vst [vmem:[#allocation2] sm:$0x1] %v15
  $region1: #{tpu_custom_call.1} parent=0
    #allocation3 [shape = 'u8[32768]{0}', space=vmem, size = 0x8000, scoped, tag = 'output window, operand 0']
    #allocation4 [shape = 's32[2]{0}', space=sflag, size = 0x8, scoped, tag = 'scoped memory for tpu_custom_call.1']
    %17 = vsyncpa [#allocation4], 0
    %s18 = scalar_lea.sflag [#allocation4], 1
    %19 = vsyncpa %s18, 0
    loop: start=0, step=1, limit=4
    $region2: #{tpu_custom_call.1} parent=1 // loop_pre_header
      _
    $region3: #{tpu_custom_call.1} parent=1 // loop_header
      %s21 = sphi 0, %s25
      %p22 = scmp.ge.s32.totalorder %s21, 4
      %s31 = sphi 0, %s33
      %s34 = sphi 0, %s31
      %s35 = sphi 0, %s34
      %s51 = sphi 0, %s35
      %s55 = sphi 0, %s55
      %s57 = sphi 0, %s55
      %s58 = sphi 0, %s57
      %s72 = sphi 0, %s58
      %s76 = sphi 0, %s76
      %s78 = sphi 0, %s76
      %s79 = sphi 0, %s78
      %s93 = sphi 0, %s79
      %s97 = sphi 0, %s97
      %s99 = sphi 0, %s97
      %s100 = sphi 0, %s99
      %s114 = sphi 0, %s100
      %s118 = sphi 0, %s118
      %s120 = sphi 0, %s118
      %s121 = sphi 0, %s120
      %s135 = sphi 0, %s121
      %s139 = sphi 0, %s139
      %s141 = sphi 0, %s139
      %s142 = sphi 0, %s141
      %s156 = sphi 0, %s142
      %s160 = sphi 0, %s160
      %s162 = sphi 0, %s160
      %s163 = sphi 0, %s162
      %s177 = sphi 0, %s163
      %s181 = sphi 0, %s181
      %s183 = sphi 0, %s181
      %s184 = sphi 0, %s183
      %s198 = sphi 0, %s184
      %s202 = sphi 0, %s202
      %s204 = sphi 0, %s202
      %s205 = sphi 0, %s204
      %s219 = sphi 0, %s205
      %s223 = sphi 0, %s223
      %s225 = sphi 0, %s223
      %s226 = sphi 0, %s225
      %s240 = sphi 0, %s226
      %s246 = sphi 0, %s248
      %s249 = sphi 0, %s246
      %s250 = sphi 0, %s249
      %s266 = sphi 0, %s250
    $region4: #{tpu_custom_call.1} parent=1 // loop_header_branch
      %24 = sbr.rel (%p22) target = $region8
    $region5: #{tpu_custom_call.1} parent=1 // loop_body
      %s26 = ssub.s32 %s21, 1
      %s27 = ssub.s32 %s21, 2
      %s28 = sadd.s32 %s21, 1
      %s29 = ssub.s32 %s21, %s28
      %p30 = scmp.eq.s32.totalorder %s29, 0
      %s32 = sadd.s32 %s31, 1
      %s33 = scalar_select %p30, %s31, %s32
      %p36 = pneg %p30
      %p37 = scmp.eq.s32.totalorder %s21, 1
      %p38 = por %p36, %p37
      %p39 = scmp.ne.s32.totalorder %s31, %s34
      %p40 = scmp.eq.s32.totalorder %s21, 0
      %p41 = por %p39, %p40
      %p42 = scmp.ne.s32.totalorder %s31, %s34
      %p43 = scmp.eq.s32.totalorder %s26, 1
      %p44 = por %p42, %p43
      %p45 = scmp.ne.s32.totalorder %s34, %s35
      %p46 = scmp.eq.s32.totalorder %s26, 0
      %p47 = por %p45, %p46
      %p48 = scmp.ne.s32.totalorder %s34, %s35
      %p49 = scmp.eq.s32.totalorder %s27, 1
      %p50 = por %p48, %p49
      %p52 = scmp.ne.s32.totalorder %s35, %s51
      %p53 = scmp.eq.s32.totalorder %s27, 0
      %p54 = por %p52, %p53
      %s56 = sadd.s32 %s55, 1
      %p59 = scmp.eq.s32.totalorder %s21, 1
      %p60 = scmp.ne.s32.totalorder %s55, %s57
      %p61 = scmp.eq.s32.totalorder %s21, 0
      %p62 = por %p60, %p61
      %p63 = scmp.ne.s32.totalorder %s55, %s57
      %p64 = scmp.eq.s32.totalorder %s26, 1
      %p65 = por %p63, %p64
      %p66 = scmp.ne.s32.totalorder %s57, %s58
      %p67 = scmp.eq.s32.totalorder %s26, 0
      %p68 = por %p66, %p67
      %p69 = scmp.ne.s32.totalorder %s57, %s58
      %p70 = scmp.eq.s32.totalorder %s27, 1
      %p71 = por %p69, %p70
      %p73 = scmp.ne.s32.totalorder %s58, %s72
      %p74 = scmp.eq.s32.totalorder %s27, 0
      %p75 = por %p73, %p74
      %s77 = sadd.s32 %s76, 1
      %p80 = scmp.eq.s32.totalorder %s21, 1
      %p81 = scmp.ne.s32.totalorder %s76, %s78
      %p82 = scmp.eq.s32.totalorder %s21, 0
      %p83 = por %p81, %p82
      %p84 = scmp.ne.s32.totalorder %s76, %s78
      %p85 = scmp.eq.s32.totalorder %s26, 1
      %p86 = por %p84, %p85
      %p87 = scmp.ne.s32.totalorder %s78, %s79
      %p88 = scmp.eq.s32.totalorder %s26, 0
      %p89 = por %p87, %p88
      %p90 = scmp.ne.s32.totalorder %s78, %s79
      %p91 = scmp.eq.s32.totalorder %s27, 1
      %p92 = por %p90, %p91
      %p94 = scmp.ne.s32.totalorder %s79, %s93
      %p95 = scmp.eq.s32.totalorder %s27, 0
      %p96 = por %p94, %p95
      %s98 = sadd.s32 %s97, 1
      %p101 = scmp.eq.s32.totalorder %s21, 1
      %p102 = scmp.ne.s32.totalorder %s97, %s99
      %p103 = scmp.eq.s32.totalorder %s21, 0
      %p104 = por %p102, %p103
      %p105 = scmp.ne.s32.totalorder %s97, %s99
      %p106 = scmp.eq.s32.totalorder %s26, 1
      %p107 = por %p105, %p106
      %p108 = scmp.ne.s32.totalorder %s99, %s100
      %p109 = scmp.eq.s32.totalorder %s26, 0
      %p110 = por %p108, %p109
      %p111 = scmp.ne.s32.totalorder %s99, %s100
      %p112 = scmp.eq.s32.totalorder %s27, 1
      %p113 = por %p111, %p112
      %p115 = scmp.ne.s32.totalorder %s100, %s114
      %p116 = scmp.eq.s32.totalorder %s27, 0
      %p117 = por %p115, %p116
      %s119 = sadd.s32 %s118, 1
      %p122 = scmp.eq.s32.totalorder %s21, 1
      %p123 = scmp.ne.s32.totalorder %s118, %s120
      %p124 = scmp.eq.s32.totalorder %s21, 0
      %p125 = por %p123, %p124
      %p126 = scmp.ne.s32.totalorder %s118, %s120
      %p127 = scmp.eq.s32.totalorder %s26, 1
      %p128 = por %p126, %p127
      %p129 = scmp.ne.s32.totalorder %s120, %s121
      %p130 = scmp.eq.s32.totalorder %s26, 0
      %p131 = por %p129, %p130
      %p132 = scmp.ne.s32.totalorder %s120, %s121
      %p133 = scmp.eq.s32.totalorder %s27, 1
      %p134 = por %p132, %p133
      %p136 = scmp.ne.s32.totalorder %s121, %s135
      %p137 = scmp.eq.s32.totalorder %s27, 0
      %p138 = por %p136, %p137
      %s140 = sadd.s32 %s139, 1
      %p143 = scmp.eq.s32.totalorder %s21, 1
      %p144 = scmp.ne.s32.totalorder %s139, %s141
      %p145 = scmp.eq.s32.totalorder %s21, 0
      %p146 = por %p144, %p145
      %p147 = scmp.ne.s32.totalorder %s139, %s141
      %p148 = scmp.eq.s32.totalorder %s26, 1
      %p149 = por %p147, %p148
      %p150 = scmp.ne.s32.totalorder %s141, %s142
      %p151 = scmp.eq.s32.totalorder %s26, 0
      %p152 = por %p150, %p151
      %p153 = scmp.ne.s32.totalorder %s141, %s142
      %p154 = scmp.eq.s32.totalorder %s27, 1
      %p155 = por %p153, %p154
      %p157 = scmp.ne.s32.totalorder %s142, %s156
      %p158 = scmp.eq.s32.totalorder %s27, 0
      %p159 = por %p157, %p158
      %s161 = sadd.s32 %s160, 1
      %p164 = scmp.eq.s32.totalorder %s21, 1
      %p165 = scmp.ne.s32.totalorder %s160, %s162
      %p166 = scmp.eq.s32.totalorder %s21, 0
      %p167 = por %p165, %p166
      %p168 = scmp.ne.s32.totalorder %s160, %s162
      %p169 = scmp.eq.s32.totalorder %s26, 1
      %p170 = por %p168, %p169
      %p171 = scmp.ne.s32.totalorder %s162, %s163
      %p172 = scmp.eq.s32.totalorder %s26, 0
      %p173 = por %p171, %p172
      %p174 = scmp.ne.s32.totalorder %s162, %s163
      %p175 = scmp.eq.s32.totalorder %s27, 1
      %p176 = por %p174, %p175
      %p178 = scmp.ne.s32.totalorder %s163, %s177
      %p179 = scmp.eq.s32.totalorder %s27, 0
      %p180 = por %p178, %p179
      %s182 = sadd.s32 %s181, 1
      %p185 = scmp.eq.s32.totalorder %s21, 1
      %p186 = scmp.ne.s32.totalorder %s181, %s183
      %p187 = scmp.eq.s32.totalorder %s21, 0
      %p188 = por %p186, %p187
      %p189 = scmp.ne.s32.totalorder %s181, %s183
      %p190 = scmp.eq.s32.totalorder %s26, 1
      %p191 = por %p189, %p190
      %p192 = scmp.ne.s32.totalorder %s183, %s184
      %p193 = scmp.eq.s32.totalorder %s26, 0
      %p194 = por %p192, %p193
      %p195 = scmp.ne.s32.totalorder %s183, %s184
      %p196 = scmp.eq.s32.totalorder %s27, 1
      %p197 = por %p195, %p196
      %p199 = scmp.ne.s32.totalorder %s184, %s198
      %p200 = scmp.eq.s32.totalorder %s27, 0
      %p201 = por %p199, %p200
      %s203 = sadd.s32 %s202, 1
      %p206 = scmp.eq.s32.totalorder %s21, 1
      %p207 = scmp.ne.s32.totalorder %s202, %s204
      %p208 = scmp.eq.s32.totalorder %s21, 0
      %p209 = por %p207, %p208
      %p210 = scmp.ne.s32.totalorder %s202, %s204
      %p211 = scmp.eq.s32.totalorder %s26, 1
      %p212 = por %p210, %p211
      %p213 = scmp.ne.s32.totalorder %s204, %s205
      %p214 = scmp.eq.s32.totalorder %s26, 0
      %p215 = por %p213, %p214
      %p216 = scmp.ne.s32.totalorder %s204, %s205
      %p217 = scmp.eq.s32.totalorder %s27, 1
      %p218 = por %p216, %p217
      %p220 = scmp.ne.s32.totalorder %s205, %s219
      %p221 = scmp.eq.s32.totalorder %s27, 0
      %p222 = por %p220, %p221
      %s224 = sadd.s32 %s223, 1
      %p227 = scmp.eq.s32.totalorder %s21, 1
      %p228 = scmp.ne.s32.totalorder %s223, %s225
      %p229 = scmp.eq.s32.totalorder %s21, 0
      %p230 = por %p228, %p229
      %p231 = scmp.ne.s32.totalorder %s223, %s225
      %p232 = scmp.eq.s32.totalorder %s26, 1
      %p233 = por %p231, %p232
      %p234 = scmp.ne.s32.totalorder %s225, %s226
      %p235 = scmp.eq.s32.totalorder %s26, 0
      %p236 = por %p234, %p235
      %p237 = scmp.ne.s32.totalorder %s225, %s226
      %p238 = scmp.eq.s32.totalorder %s27, 1
      %p239 = por %p237, %p238
      %p241 = scmp.ne.s32.totalorder %s226, %s240
      %p242 = scmp.eq.s32.totalorder %s27, 0
      %p243 = por %p241, %p242
      %s244 = ssub.s32 %s21, %s28
      %p245 = scmp.eq.s32.totalorder %s244, 0
      %s247 = sadd.s32 %s246, 1
      %s248 = scalar_select %p245, %s246, %s247
      %p251 = pneg %p245
      %p252 = scmp.eq.s32.totalorder %s21, 1
      %p253 = por %p251, %p252
      %p254 = scmp.ne.s32.totalorder %s246, %s249
      %p255 = scmp.eq.s32.totalorder %s21, 0
      %p256 = por %p254, %p255
      %p257 = scmp.ne.s32.totalorder %s246, %s249
      %p258 = scmp.eq.s32.totalorder %s26, 1
      %p259 = por %p257, %p258
      %p260 = scmp.ne.s32.totalorder %s249, %s250
      %p261 = scmp.eq.s32.totalorder %s26, 0
      %p262 = por %p260, %p261
      %p263 = scmp.ne.s32.totalorder %s249, %s250
      %p264 = scmp.eq.s32.totalorder %s27, 1
      %p265 = por %p263, %p264
      %p267 = scmp.ne.s32.totalorder %s250, %s266
      %p268 = scmp.eq.s32.totalorder %s27, 0
      %p269 = por %p267, %p268
      %p270 = scmp.le.s32.totalorder 1, %s21
      %p271 = scmp.lt.s32.totalorder %s21, 3
      %p272 = pnand %p270, %p271
      %p273 = pneg %p272
      // Predicated region
      $region9: #{tpu_custom_call.1} parent=5 // pred_check
        _
      $region10: #{tpu_custom_call.1} parent=5 // pred_check_branch
        %275 = sbr.rel (%p272) target = $region12
      $region11: #{tpu_custom_call.1} parent=5 // pred_region
        %s276 = ssub.s32 %s21, 1
        // Predicated region
        $region13: #{tpu_custom_call.1} parent=11 // pred_check
          %p277 = pneg %p68
        $region14: #{tpu_custom_call.1} parent=11 // pred_check_branch
          %279 = sbr.rel (%p277) target = $region16
        $region15: #{tpu_custom_call.1} parent=11 // pred_region
          _
        $region16: #{tpu_custom_call.1} parent=11 // pred_fallthru
          _
        // Predicated region
        $region17: #{tpu_custom_call.1} parent=11 // pred_check
          %p280 = pneg %p89
        $region18: #{tpu_custom_call.1} parent=11 // pred_check_branch
          %282 = sbr.rel (%p280) target = $region20
        $region19: #{tpu_custom_call.1} parent=11 // pred_region
          _
        $region20: #{tpu_custom_call.1} parent=11 // pred_fallthru
          _
        // Predicated region
        $region21: #{tpu_custom_call.1} parent=11 // pred_check
          %p283 = pneg %p110
        $region22: #{tpu_custom_call.1} parent=11 // pred_check_branch
          %285 = sbr.rel (%p283) target = $region24
        $region23: #{tpu_custom_call.1} parent=11 // pred_region
          _
        $region24: #{tpu_custom_call.1} parent=11 // pred_fallthru
          _
        // Predicated region
        $region25: #{tpu_custom_call.1} parent=11 // pred_check
          %p286 = pneg %p131
        $region26: #{tpu_custom_call.1} parent=11 // pred_check_branch
          %288 = sbr.rel (%p286) target = $region28
        $region27: #{tpu_custom_call.1} parent=11 // pred_region
          _
        $region28: #{tpu_custom_call.1} parent=11 // pred_fallthru
          _
        // Predicated region
        $region29: #{tpu_custom_call.1} parent=11 // pred_check
          %p289 = pneg %p152
        $region30: #{tpu_custom_call.1} parent=11 // pred_check_branch
          %291 = sbr.rel (%p289) target = $region32
        $region31: #{tpu_custom_call.1} parent=11 // pred_region
          _
        $region32: #{tpu_custom_call.1} parent=11 // pred_fallthru
          _
        // Predicated region
        $region33: #{tpu_custom_call.1} parent=11 // pred_check
          %p292 = pneg %p173
        $region34: #{tpu_custom_call.1} parent=11 // pred_check_branch
          %294 = sbr.rel (%p292) target = $region36
        $region35: #{tpu_custom_call.1} parent=11 // pred_region
          _
        $region36: #{tpu_custom_call.1} parent=11 // pred_fallthru
          _
        // Predicated region
        $region37: #{tpu_custom_call.1} parent=11 // pred_check
          %p295 = pneg %p194
        $region38: #{tpu_custom_call.1} parent=11 // pred_check_branch
          %297 = sbr.rel (%p295) target = $region40
        $region39: #{tpu_custom_call.1} parent=11 // pred_region
          _
        $region40: #{tpu_custom_call.1} parent=11 // pred_fallthru
          _
        // Predicated region
        $region41: #{tpu_custom_call.1} parent=11 // pred_check
          %p298 = pneg %p215
        $region42: #{tpu_custom_call.1} parent=11 // pred_check_branch
          %300 = sbr.rel (%p298) target = $region44
        $region43: #{tpu_custom_call.1} parent=11 // pred_region
          _
        $region44: #{tpu_custom_call.1} parent=11 // pred_fallthru
          _
        // Predicated region
        $region45: #{tpu_custom_call.1} parent=11 // pred_check
          %p301 = pneg %p236
        $region46: #{tpu_custom_call.1} parent=11 // pred_check_branch
          %303 = sbr.rel (%p301) target = $region48
        $region47: #{tpu_custom_call.1} parent=11 // pred_region
          _
        $region48: #{tpu_custom_call.1} parent=11 // pred_fallthru
          _
      $region12: #{tpu_custom_call.1} parent=5 // pred_fallthru
        _
      %p304 = scmp.lt.s32.totalorder %s21, 2
      // Predicated region
      $region49: #{tpu_custom_call.1} parent=5 // pred_check
        %p305 = pneg %p304
      $region50: #{tpu_custom_call.1} parent=5 // pred_check_branch
        %307 = sbr.rel (%p305) target = $region52
      $region51: #{tpu_custom_call.1} parent=5 // pred_region
        // Predicated region
        $region53: #{tpu_custom_call.1} parent=51 // pred_check
          %p308 = pneg %p41
        $region54: #{tpu_custom_call.1} parent=51 // pred_check_branch
          %310 = sbr.rel (%p308) target = $region56
        $region55: #{tpu_custom_call.1} parent=51 // pred_region
          %p311 = scmp.lt.s32.totalorder %s21, 1
          %s312 = scalar_select %p311, %s21, 1
          %s313 = smul.addr %s312, 4
          %s314 = smul.addr %s313, 8
          %s315 = scalar_lea.vmem %s0, %s314
        $region56: #{tpu_custom_call.1} parent=51 // pred_fallthru
          _
      $region52: #{tpu_custom_call.1} parent=5 // pred_fallthru
        _
      %p316 = scmp.le.s32.totalorder 1, %s21
      %p317 = scmp.lt.s32.totalorder %s21, 3
      %p318 = pnand %p316, %p317
      %p319 = pneg %p318
      // Predicated region
      $region57: #{tpu_custom_call.1} parent=5 // pred_check
        _
      $region58: #{tpu_custom_call.1} parent=5 // pred_check_branch
        %321 = sbr.rel (%p318) target = $region60
      $region59: #{tpu_custom_call.1} parent=5 // pred_region
        %s322 = ssub.s32 %s21, 1
        %p323 = scmp.lt.s32.totalorder %s26, 1
        %s324 = scalar_select %p323, %s26, 1
        %s325 = smul.addr %s324, 4
        %s326 = smul.addr %s325, 8
        %s327 = scalar_lea.vmem %s0, %s326
        %p328 = pneg %p47
        %p329 = pneg %p44
        %p330 = pneg %p68
        %p331 = pneg %p65
        %p332 = pneg %p89
        %p333 = pneg %p86
        %p334 = pneg %p110
        %p335 = pneg %p107
        %p336 = pneg %p131
        %p337 = pneg %p128
        %p338 = pneg %p152
        %p339 = pneg %p149
        %p340 = pneg %p173
        %p341 = pneg %p170
        %p342 = pneg %p194
        %p343 = pneg %p191
        %p344 = pneg %p215
        %p345 = pneg %p212
        %p346 = pneg %p236
        %p347 = pneg %p233
        %p348 = pneg %p262
        %p349 = pneg %p259
        %s350 = sand.u32 %s249, 1
        %s351 = scalar_lea.sflag [#allocation4], %s350
        %s352 = sand.u32 %s249, 1
        %s353 = smul.addr %s352, 32
        %s354 = scalar_lea.vmem [#allocation3], %s353
        %p355 = scmp.lt.s32.totalorder %s26, 1
        %s356 = scalar_select %p355, %s26, 1
        %s357 = smul.addr %s356, 4
        %s358 = smul.addr %s357, 8
        %s359 = scalar_lea.vmem %s0, %s358
        %v360 = vld [vmem:[%s359] sm:$0xff]
        %v361 = vld [vmem:[%s359 + $0x8] sm:$0xff]
        %v362 = vld [vmem:[%s359 + $0x10] sm:$0xff]
        %v363 = vld [vmem:[%s359 + $0x18] sm:$0xff]
        %v364 = vld [vmem:[%s1] sm:$0x1]
        %v365 = vld [vmem:[#allocation2] sm:$0x1]
        %367 = vset.pattern.permute.xlu0 0
        %368 = vperm.xlu0 %367, %v365
        %v369 = vpop.permute.xlu0 %368
        %v371 = vlaneseq
        %v372 = vshrl.u32 %v371, 7
        %v373 = vsub.s32 0, %v372
        %v374 = vrot.slane %v369, %v373
        %vm375 = vcmask 130048
        %v377 = vsel %vm375, %v364, 0
        %379 = vmatprep.subr.mxu0 %v361
        %380 = vmatpush1.msra.mxu0 %v360
        %381 = vmatprep.subr.mxu0 %v363
        %382 = vmatpush1.msra.mxu0 %v362
        %383 = vmatprep.subr.mxu0 0.0
        %384 = vmatpush1.msra.mxu0 0.0
        %385 = vmatprep.subr.mxu0 0.0
        %386 = vmatpush1.msra.mxu0 0.0
        %387 = vmatprep.subr.mxu0 0.0
        %388 = vmatpush1.msra.mxu0 0.0
        %389 = vmatprep.subr.mxu0 0.0
        %390 = vmatpush1.msra.mxu0 0.0
        %391 = vmatprep.subr.mxu0 0.0
        %392 = vmatpush1.msra.mxu0 0.0
        %393 = vmatprep.subr.mxu0 0.0
        %394 = vmatpush1.msra.mxu0 0.0
        %395 = vmatprep.subr.mxu0 0.0
        %396 = vmatpush1.msra.mxu0 0.0
        %397 = vmatprep.subr.mxu0 0.0
        %398 = vmatpush1.msra.mxu0 0.0
        %399 = vmatprep.subr.mxu0 0.0
        %400 = vmatpush1.msra.mxu0 0.0
        %401 = vmatprep.subr.mxu0 0.0
        %402 = vmatpush1.msra.mxu0 0.0
        %403 = vmatprep.subr.mxu0 0.0
        %404 = vmatpush1.msra.mxu0 0.0
        %405 = vmatprep.subr.mxu0 0.0
        %406 = vmatpush1.msra.mxu0 0.0
        %407 = vmatprep.subr.mxu0 0.0
        %408 = vmatpush1.msra.mxu0 0.0
        %409 = vmatprep.subr.mxu0 0.0
        %410 = vmatpush1.msra.mxu0 0.0
        %411 = vmatprep.subr.mxu0 0.0
        %412 = vmatpush1.msra.mxu0 0.0
        %413 = vmatprep.subr.mxu0 0.0
        %414 = vmatpush1.msra.mxu0 0.0
        %415 = vmatprep.subr.mxu0 0.0
        %416 = vmatpush1.msra.mxu0 0.0
        %417 = vmatprep.subr.mxu0 0.0
        %418 = vmatpush1.msra.mxu0 0.0
        %419 = vmatprep.subr.mxu0 0.0
        %420 = vmatpush1.msra.mxu0 0.0
        %421 = vmatprep.subr.mxu0 0.0
        %422 = vmatpush1.msra.mxu0 0.0
        %423 = vmatprep.subr.mxu0 0.0
        %424 = vmatpush1.msra.mxu0 0.0
        %425 = vmatprep.subr.mxu0 0.0
        %426 = vmatpush1.msra.mxu0 0.0
        %427 = vmatprep.subr.mxu0 0.0
        %428 = vmatpush1.msra.mxu0 0.0
        %429 = vmatprep.subr.mxu0 0.0
        %430 = vmatpush1.msra.mxu0 0.0
        %431 = vmatprep.subr.mxu0 0.0
        %432 = vmatpush1.msra.mxu0 0.0
        %433 = vmatprep.subr.mxu0 0.0
        %434 = vmatpush1.msra.mxu0 0.0
        %435 = vmatprep.subr.mxu0 0.0
        %436 = vmatpush1.msra.mxu0 0.0
        %437 = vmatprep.subr.mxu0 0.0
        %438 = vmatpush1.msra.mxu0 0.0
        %439 = vmatprep.subr.mxu0 0.0
        %440 = vmatpush1.msra.mxu0 0.0
        %441 = vmatprep.subr.mxu0 0.0
        %442 = vmatpush1.msra.mxu0 0.0
        %443 = vmatprep.mubr.f32.mxu0 0.0
        %444 = vmatmul.mubr.f32.gmra.mrb[0].mxu0 %v377
        %v445 = vpop.f32.mrb[0].mxu0
        %v446 = vadd.f32 %v374, %v445
        %v447 = vpop.f32.mrb[0].mxu0
        %v448 = vadd.f32 %v374, %v447
        %449 = vdwg.mxu0
        %vm450 = vcmask 1040384
        %v451 = vsel %vm450, %v446, -inf
        %v452 = vsel %vm450, %v448, -inf
        %v453 = vmax.f32 %v451, %v452
        %454 = vmax.xlane.f32.xlu0 %v453
        %v455 = vpop.xlane.xlu0 %454
        %v456 = vsub.f32 %v446, %v455
        %v457 = vsub.f32 %v448, %v455
        %v458 = vmul.f32 %v456, 1.442695
        %v459 = vpow.pop %v458
        %v460 = vmul.f32 %v457, 1.442695
        %v461 = vpow.pop %v460
        %v462 = vsel %vm450, %v459, 0.0
        %v463 = vsel %vm450, %v461, 0.0
        %v464 = vadd.f32 %v462, %v463
        %465 = vadd.xlane.f32.xlu0 %v464
        %v466 = vpop.xlane.xlu0 %465
        %v467 = vlaneseq
        %v468 = vshrl.u32 %v467, 7
        %v469 = vsub.s32 0, %v468
        %v470 = vrot.slane %v459, %v469
        %v471 = vlaneseq
        %v472 = vshrl.u32 %v471, 7
        %v473 = vsub.s32 0, %v472
        %v474 = vrot.slane %v461, %v473
        %v475 = vmul.f32 %v360, %v470
        %v476 = vmul.f32 %v361, %v474
        %v477 = vmul.f32 %v362, %v470
        %v478 = vmul.f32 %v363, %v474
        %v479 = vadd.f32 %v475, %v476
        %480 = vadd.xlane.f32.xlu0 %v479
        %v481 = vpop.xlane.xlu0 %480
        %v482 = vadd.f32 %v477, %v478
        %483 = vadd.xlane.f32.xlu0 %v482
        %v484 = vpop.xlane.xlu0 %483
        %v485 = vlaneseq
        %v486 = vshrl.u32 %v485, 7
        %v487 = vsub.s32 0, %v486
        %v488 = vrot.slane %v466, %v487
        %v489 = vrcp.pop %v488
        %v490 = vmul.f32 %v481, %v489
        %v491 = vmul.f32 %v484, %v489
        %v492 = vld [vmem:[%s3] sm:$0xff]
        %v493 = vld [vmem:[%s3 + $0x8] sm:$0xff]
        %v494 = vmul.f32 %v490, %v492
        %v495 = vmul.f32 %v491, %v493
        %v496 = vld [vmem:[%s4] sm:$0xf]
        %v497 = vld [vmem:[%s5] sm:$0xf]
        %v498 = vld [vmem:[%s6] sm:$0xf]
        %v499 = vld [vmem:[%s7] sm:$0xf]
        %v500 = vld [vmem:[%s8] sm:$0xff]
        %v501 = vld [vmem:[%s8 + $0x8] sm:$0xff]
        %v502 = vld [vmem:[%s9] sm:$0xff]
        %v503 = vld [vmem:[%s9 + $0x8] sm:$0xff]
        %v505 = vsel %vm375, %v496, 0
        %507 = vmatprep.subr.mxu0 0.0
        %508 = vmatpush1.msra.mxu0 %v494
        %509 = vmatprep.subr.mxu0 0.0
        %510 = vmatpush1.msra.mxu0 %v495
        %511 = vmatprep.subr.mxu0 0.0
        %512 = vmatpush1.msra.mxu0 0.0
        %513 = vmatprep.subr.mxu0 0.0
        %514 = vmatpush1.msra.mxu0 0.0
        %515 = vmatprep.subr.mxu0 0.0
        %516 = vmatpush1.msra.mxu0 0.0
        %517 = vmatprep.subr.mxu0 0.0
        %518 = vmatpush1.msra.mxu0 0.0
        %519 = vmatprep.subr.mxu0 0.0
        %520 = vmatpush1.msra.mxu0 0.0
        %521 = vmatprep.subr.mxu0 0.0
        %522 = vmatpush1.msra.mxu0 0.0
        %523 = vmatprep.subr.mxu0 0.0
        %524 = vmatpush1.msra.mxu0 0.0
        %525 = vmatprep.subr.mxu0 0.0
        %526 = vmatpush1.msra.mxu0 0.0
        %527 = vmatprep.subr.mxu0 0.0
        %528 = vmatpush1.msra.mxu0 0.0
        %529 = vmatprep.subr.mxu0 0.0
        %530 = vmatpush1.msra.mxu0 0.0
        %531 = vmatprep.subr.mxu0 0.0
        %532 = vmatpush1.msra.mxu0 0.0
        %533 = vmatprep.subr.mxu0 0.0
        %534 = vmatpush1.msra.mxu0 0.0
        %535 = vmatprep.subr.mxu0 0.0
        %536 = vmatpush1.msra.mxu0 0.0
        %537 = vmatprep.subr.mxu0 0.0
        %538 = vmatpush1.msra.mxu0 0.0
        %539 = vmatprep.subr.mxu0 0.0
        %540 = vmatpush1.msra.mxu0 0.0
        %541 = vmatprep.subr.mxu0 0.0
        %542 = vmatpush1.msra.mxu0 0.0
        %543 = vmatprep.subr.mxu0 0.0
        %544 = vmatpush1.msra.mxu0 0.0
        %545 = vmatprep.subr.mxu0 0.0
        %546 = vmatpush1.msra.mxu0 0.0
        %547 = vmatprep.subr.mxu0 0.0
        %548 = vmatpush1.msra.mxu0 0.0
        %549 = vmatprep.subr.mxu0 0.0
        %550 = vmatpush1.msra.mxu0 0.0
        %551 = vmatprep.subr.mxu0 0.0
        %552 = vmatpush1.msra.mxu0 0.0
        %553 = vmatprep.subr.mxu0 0.0
        %554 = vmatpush1.msra.mxu0 0.0
        %555 = vmatprep.subr.mxu0 0.0
        %556 = vmatpush1.msra.mxu0 0.0
        %557 = vmatprep.subr.mxu0 0.0
        %558 = vmatpush1.msra.mxu0 0.0
        %559 = vmatprep.subr.mxu0 0.0
        %560 = vmatpush1.msra.mxu0 0.0
        %561 = vmatprep.subr.mxu0 0.0
        %562 = vmatpush1.msra.mxu0 0.0
        %563 = vmatprep.subr.mxu0 0.0
        %564 = vmatpush1.msra.mxu0 0.0
        %565 = vmatprep.subr.mxu0 0.0
        %566 = vmatpush1.msra.mxu0 0.0
        %567 = vmatprep.subr.mxu0 0.0
        %568 = vmatpush1.msra.mxu0 0.0
        %569 = vmatprep.subr.mxu0 0.0
        %570 = vmatpush1.msra.mxu0 0.0
        %571 = vmatprep.mubr.f32.mxu0 0.0
        %572 = vmatmul.mubr.f32.gmra.mrb[0].mxu0 %v505
        %v573 = vpop.f32.mrb[0].mxu0
        %v574 = vadd.f32 %v497, %v573
        %v575 = vpop.f32.mrb[0].mxu0
        %576 = vdwg.mxu0
        %vm577 = vcmask 3072
        %v578 = vsel %vm577, %v574, 0.0
        %v579 = vrot.slane %v578, 4
        %v580 = vadd.f32 %v578, %v579
        %v581 = vrot.slane %v580, 2
        %v582 = vadd.f32 %v580, %v581
        %v583 = vrot.slane %v582, 1
        %v584 = vadd.f32 %v582, %v583
        %v585 = vrcp.pop 4.0
        %v586 = vmul.f32 %v584, %v585
        %v587 = vsub.f32 %v574, %v586
        %v588 = vmul.f32 %v587, %v587
        %v589 = vsel %vm577, %v588, 0.0
        %v590 = vrot.slane %v589, 4
        %v591 = vadd.f32 %v589, %v590
        %v592 = vrot.slane %v591, 2
        %v593 = vadd.f32 %v591, %v592
        %v594 = vrot.slane %v593, 1
        %v595 = vadd.f32 %v593, %v594
        %v596 = vmul.f32 %v595, %v585
        %v597 = vadd.f32 %v596, 1e-05
        %v598 = vrsqrt.pop %v597
        %v599 = vmul.f32 %v587, %v598
        %v600 = vmul.f32 %v599, %v498
        %v601 = vadd.f32 %v600, %v499
        %v602 = vmax.f32 %v601, 0.0
        %vm603 = vcmask 31744
        %v605 = vsel %vm603, %v500, 0
        %v608 = vsel %vm603, %v501, 0
        %vm610 = vcmask 1043456
        %v612 = vsel %vm610, %v602, 0
        %614 = vmatprep.subr.mxu0 0.0
        %615 = vmatpush1.msra.mxu0 %v612
        %616 = vmatprep.subr.mxu0 0.0
        %617 = vmatpush1.msra.mxu0 0.0
        %618 = vmatprep.subr.mxu0 0.0
        %619 = vmatpush1.msra.mxu0 0.0
        %620 = vmatprep.subr.mxu0 0.0
        %621 = vmatpush1.msra.mxu0 0.0
        %622 = vmatprep.subr.mxu0 0.0
        %623 = vmatpush1.msra.mxu0 0.0
        %624 = vmatprep.subr.mxu0 0.0
        %625 = vmatpush1.msra.mxu0 0.0
        %626 = vmatprep.subr.mxu0 0.0
        %627 = vmatpush1.msra.mxu0 0.0
        %628 = vmatprep.subr.mxu0 0.0
        %629 = vmatpush1.msra.mxu0 0.0
        %630 = vmatprep.subr.mxu0 0.0
        %631 = vmatpush1.msra.mxu0 0.0
        %632 = vmatprep.subr.mxu0 0.0
        %633 = vmatpush1.msra.mxu0 0.0
        %634 = vmatprep.subr.mxu0 0.0
        %635 = vmatpush1.msra.mxu0 0.0
        %636 = vmatprep.subr.mxu0 0.0
        %637 = vmatpush1.msra.mxu0 0.0
        %638 = vmatprep.subr.mxu0 0.0
        %639 = vmatpush1.msra.mxu0 0.0
        %640 = vmatprep.subr.mxu0 0.0
        %641 = vmatpush1.msra.mxu0 0.0
        %642 = vmatprep.subr.mxu0 0.0
        %643 = vmatpush1.msra.mxu0 0.0
        %644 = vmatprep.subr.mxu0 0.0
        %645 = vmatpush1.msra.mxu0 0.0
        %646 = vmatprep.subr.mxu0 0.0
        %647 = vmatpush1.msra.mxu0 0.0
        %648 = vmatprep.subr.mxu0 0.0
        %649 = vmatpush1.msra.mxu0 0.0
        %650 = vmatprep.subr.mxu0 0.0
        %651 = vmatpush1.msra.mxu0 0.0
        %652 = vmatprep.subr.mxu0 0.0
        %653 = vmatpush1.msra.mxu0 0.0
        %654 = vmatprep.subr.mxu0 0.0
        %655 = vmatpush1.msra.mxu0 0.0
        %656 = vmatprep.subr.mxu0 0.0
        %657 = vmatpush1.msra.mxu0 0.0
        %658 = vmatprep.subr.mxu0 0.0
        %659 = vmatpush1.msra.mxu0 0.0
        %660 = vmatprep.subr.mxu0 0.0
        %661 = vmatpush1.msra.mxu0 0.0
        %662 = vmatprep.subr.mxu0 0.0
        %663 = vmatpush1.msra.mxu0 0.0
        %664 = vmatprep.subr.mxu0 0.0
        %665 = vmatpush1.msra.mxu0 0.0
        %666 = vmatprep.subr.mxu0 0.0
        %667 = vmatpush1.msra.mxu0 0.0
        %668 = vmatprep.subr.mxu0 0.0
        %669 = vmatpush1.msra.mxu0 0.0
        %670 = vmatprep.subr.mxu0 0.0
        %671 = vmatpush1.msra.mxu0 0.0
        %672 = vmatprep.subr.mxu0 0.0
        %673 = vmatpush1.msra.mxu0 0.0
        %674 = vmatprep.subr.mxu0 0.0
        %675 = vmatpush1.msra.mxu0 0.0
        %676 = vmatprep.subr.mxu0 0.0
        %677 = vmatpush1.msra.mxu0 0.0
        %678 = vmatprep.mubr.f32.mxu0 0.0
        %679 = vmatmul.mubr.f32.gmra.mrb[0].mxu0 %v605
        %v680 = vpop.f32.mrb[0].mxu0
        %v681 = vadd.f32 %v502, %v680
        %v682 = vpop.f32.mrb[0].mxu0
        %683 = vmatprep.mubr.f32.mxu0 0.0
        %684 = vmatmul.mubr.f32.gmra.mrb[0].mxu0 %v608
        %v685 = vpop.f32.mrb[0].mxu0
        %v686 = vadd.f32 %v503, %v685
        %v687 = vpop.f32.mrb[0].mxu0
        %688 = vdwg.mxu0
        %690 = vset.pattern.permute.xlu0 0
        %691 = vperm.xlu0 %690, %v681
        %v692 = vpop.permute.xlu0 %691
        %695 = vset.pattern.permute.xlu0 0
        %696 = vperm.xlu0 %695, %v686
        %v697 = vpop.permute.xlu0 %696
        %v699 = vadd.f32 %v360, %v692
        %v700 = vadd.f32 %v361, %v692
        %v701 = vadd.f32 %v362, %v697
        %v702 = vadd.f32 %v363, %v697
        %703 = vst [vmem:[%s354] sm:$0xff] %v699
        %704 = vst [vmem:[%s354 + $0x8] sm:$0xff] %v700
        %705 = vst [vmem:[%s354 + $0x10] sm:$0xff] %v701
        %706 = vst [vmem:[%s354 + $0x18] sm:$0xff] %v702
        %s707 = sand.u32 %s249, 1
        %s708 = scalar_lea.sflag [#allocation4], %s707
        %s709 = sand.u32 %s249, 1
        %s710 = smul.addr %s709, 32
        %s711 = scalar_lea.vmem [#allocation3], %s710
        // Predicated region
        $region61: #{tpu_custom_call.1} parent=59 // pred_check
          %p712 = pneg %p259
        $region62: #{tpu_custom_call.1} parent=59 // pred_check_branch
          %714 = sbr.rel (%p712) target = $region64
        $region63: #{tpu_custom_call.1} parent=59 // pred_region
          %s716 = ssub.s32 512, 512
          %717 = vsyncadd %s708, %s716
          %s718 = smul.addr %s26, 4
          %s719 = smul.addr %s718, 128
          %s720 = scalar_lea.hbm %s10, %s719
          %s721 = sshll.u32 %s711, 4
          %s722 = int_to_ptr.vmem [resolvable:$true] %s721
          %727 = dma.vmem_to_hbm [thread:$0]  %s722, 512, %s720, %s708, 256, 256, 16
        $region64: #{tpu_custom_call.1} parent=59 // pred_fallthru
          _
      $region60: #{tpu_custom_call.1} parent=5 // pred_fallthru
        _
      %p728 = scmp.le.s32.totalorder 2, %s21
      // Predicated region
      $region65: #{tpu_custom_call.1} parent=5 // pred_check
        %p729 = pneg %p728
      $region66: #{tpu_custom_call.1} parent=5 // pred_check_branch
        %731 = sbr.rel (%p729) target = $region68
      $region67: #{tpu_custom_call.1} parent=5 // pred_region
        %s732 = ssub.s32 %s21, 2
        // Predicated region
        $region69: #{tpu_custom_call.1} parent=67 // pred_check
          %p733 = pneg %p265
        $region70: #{tpu_custom_call.1} parent=67 // pred_check_branch
          %735 = sbr.rel (%p733) target = $region72
        $region71: #{tpu_custom_call.1} parent=67 // pred_region
          %s736 = sand.u32 %s250, 1
          %s737 = scalar_lea.sflag [#allocation4], %s736
          %s738 = sand.u32 %s250, 1
          %s739 = smul.addr %s738, 32
          %s740 = scalar_lea.vmem [#allocation3], %s739
          %741 = dma.done %s737, 512
        $region72: #{tpu_custom_call.1} parent=67 // pred_fallthru
          _
      $region68: #{tpu_custom_call.1} parent=5 // pred_fallthru
        _
    $region6: #{tpu_custom_call.1} parent=1 // loop_footer
      %s25 = sadd.s32 1, %s21
    $region7: #{tpu_custom_call.1} parent=1 // loop_footer_branch
      %20 = sbr.rel target = $region3
    $region8: #{tpu_custom_call.1} parent=1 // loop_exit
      _
    %742 = vsyncpa [#allocation4], 1
    %s743 = scalar_lea.sflag [#allocation4], 1
    %744 = vsyncpa %s743, 1

</llo_original>
